<compile_context>
chip_gen: v6e
topology: v6e:2x2x1
jax: 0.10.0
libtpu: 0.0.40
codegen_flags: <defaults>
</compile_context>

<pallas_src>
import functools

import jax
import jax.numpy as jnp
from jax import lax
from jax.experimental import pallas as pl
from jax.experimental.pallas import tpu as pltpu

EPS = 1e-5
BLOCK_CAP_BYTES = 2 << 20  # ~2 MiB per block: inside the measured 1-4 MiB sweet spot


# ---------------------------------------------------------------------------
# Main (fused, single-pass-over-HBM) kernel: one block holds tr full rows.
# ---------------------------------------------------------------------------
def _in2d_rows_kernel(x_ref, o_ref, *, n_valid):
    """Normalize each row of a (tr, L_blk) lane-dense block over its first n_valid
    columns (columns >= n_valid are zero pad and are excluded from the variance)."""
    x = x_ref[...].astype(jnp.float32)
    l_blk = x_ref.shape[-1]
    inv_n = 1.0 / n_valid
    mean = jnp.sum(x, axis=-1, keepdims=True) * inv_n
    d = x - mean
    if l_blk != n_valid:
        # zero-padded lanes: (0 - mean)^2 would pollute the variance -> mask them.
        col = lax.broadcasted_iota(jnp.int32, x.shape, dimension=1)
        d2 = jnp.where(col < n_valid, d * d, 0.0)
    else:
        d2 = d * d
    var = jnp.sum(d2, axis=-1, keepdims=True) * inv_n  # biased (population) variance
    inv_std = lax.rsqrt(var + EPS)
    o_ref[...] = (d * inv_std).astype(o_ref.dtype)


# ---------------------------------------------------------------------------
# Fallback kernels (spatial L tiling) for rows too long to fit one block.
# ---------------------------------------------------------------------------
def _in2d_stats_kernel(x_ref, mean_ref, inv_std_ref, s1_ref, s2_ref, *, n_valid, tl):
    """Accumulate per-row sum / sum-of-squares across L tiles; finalize at the end."""
    k = pl.program_id(1)

    @pl.when(k == 0)
    def _():
        s1_ref[...] = jnp.zeros_like(s1_ref)
        s2_ref[...] = jnp.zeros_like(s2_ref)

    x = x_ref[...].astype(jnp.float32)
    col = k * tl + lax.broadcasted_iota(jnp.int32, x.shape, dimension=1)
    x = jnp.where(col < n_valid, x, 0.0)  # mask pad / out-of-bounds lanes
    s1_ref[...] += jnp.sum(x, axis=-1, keepdims=True)
    s2_ref[...] += jnp.sum(x * x, axis=-1, keepdims=True)

    @pl.when(k == pl.num_programs(1) - 1)
    def _():
        inv_n = 1.0 / n_valid
        mean = s1_ref[...] * inv_n
        var = jnp.maximum(s2_ref[...] * inv_n - mean * mean, 0.0)
        mean_ref[...] = mean
        inv_std_ref[...] = lax.rsqrt(var + EPS)


def _in2d_apply_kernel(x_ref, mean_ref, inv_std_ref, o_ref):
    x = x_ref[...].astype(jnp.float32)
    o_ref[...] = ((x - mean_ref[...]) * inv_std_ref[...]).astype(o_ref.dtype)


# ---------------------------------------------------------------------------
# Tiling helpers.
# ---------------------------------------------------------------------------
def _choose_row_tile(R, L_pad, itemsize, cap_bytes):
    """Row tile (multiple of 8, or full extent for R<=8) under the block cap.
    Returns None when even the minimal tile exceeds the cap -> spatial fallback."""
    bytes_per_row = L_pad * itemsize
    if R <= 8:
        return R if R * bytes_per_row <= cap_bytes else None
    max_tr = cap_bytes // bytes_per_row
    if max_tr < 8:
        return None
    tr = min((max_tr // 8) * 8, R)
    if tr >= R:
        # Guarantee >= 2 grid steps so both v7x TensorCores get work (DMA-bound kernel).
        tr = min(R, max(8, ((pl.cdiv(R, 2) + 7) // 8) * 8))
    return tr


def _run_fused(x2, n_valid, tr):
    R, L_pad = x2.shape
    itemsize = x2.dtype.itemsize
    kernel = functools.partial(_in2d_rows_kernel, n_valid=n_valid)
    return pl.pallas_call(
        kernel,
        out_shape=jax.ShapeDtypeStruct((R, L_pad), x2.dtype),
        grid=(pl.cdiv(R, tr),),
        in_specs=[pl.BlockSpec((tr, L_pad), lambda r: (r, 0))],
        out_specs=pl.BlockSpec((tr, L_pad), lambda r: (r, 0)),
        compiler_params=pltpu.CompilerParams(dimension_semantics=("parallel",)),
        cost_estimate=pl.CostEstimate(
            flops=6 * R * L_pad,
            transcendentals=R,
            bytes_accessed=2 * R * L_pad * itemsize,
        ),
    )(x2)


def _run_spatially_tiled(x2, n_valid, cap_bytes):
    """Two-pass path for rows too long for a single block (e.g. C=3, 1024x1024)."""
    R, L_pad = x2.shape
    itemsize = x2.dtype.itemsize
    tr = R if R <= 8 else 8
    tl = max(128, ((cap_bytes // (tr * itemsize)) // 128) * 128)
    tl = min(tl, ((L_pad + 127) // 128) * 128)
    grid = (pl.cdiv(R, tr), pl.cdiv(L_pad, tl))

    stats_kernel = functools.partial(_in2d_stats_kernel, n_valid=n_valid, tl=tl)
    mean, inv_std = pl.pallas_call(
        stats_kernel,
        out_shape=(
            jax.ShapeDtypeStruct((R, 1), jnp.float32),
            jax.ShapeDtypeStruct((R, 1), jnp.float32),
        ),
        grid=grid,
        in_specs=[pl.BlockSpec((tr, tl), lambda r, k: (r, k))],
        out_specs=(
            pl.BlockSpec((tr, 1), lambda r, k: (r, 0)),
            pl.BlockSpec((tr, 1), lambda r, k: (r, 0)),
        ),
        scratch_shapes=[
            pltpu.VMEM((tr, 1), jnp.float32),
            pltpu.VMEM((tr, 1), jnp.float32),
        ],
        compiler_params=pltpu.CompilerParams(
            dimension_semantics=("parallel", "arbitrary")
        ),
        cost_estimate=pl.CostEstimate(
            flops=3 * R * L_pad,
            transcendentals=R,
            bytes_accessed=R * L_pad * itemsize,
        ),
    )(x2)

    return pl.pallas_call(
        _in2d_apply_kernel,
        out_shape=jax.ShapeDtypeStruct((R, L_pad), x2.dtype),
        grid=grid,
        in_specs=[
            pl.BlockSpec((tr, tl), lambda r, k: (r, k)),
            pl.BlockSpec((tr, 1), lambda r, k: (r, 0)),
            pl.BlockSpec((tr, 1), lambda r, k: (r, 0)),
        ],
        out_specs=pl.BlockSpec((tr, tl), lambda r, k: (r, k)),
        compiler_params=pltpu.CompilerParams(
            dimension_semantics=("parallel", "parallel")
        ),
        cost_estimate=pl.CostEstimate(
            flops=2 * R * L_pad,
            transcendentals=0,
            bytes_accessed=2 * R * L_pad * itemsize,
        ),
    )(x2, mean, inv_std)


# ---------------------------------------------------------------------------
# Public wrapper == NormalizationLayer(in_features, norm_type='IN2D').forward(x)
# ---------------------------------------------------------------------------
def normalization_layer_in2d(x, *, block_cap_bytes=BLOCK_CAP_BYTES):
    N, C, H, W = x.shape
    R, L = N * C, H * W
    itemsize = x.dtype.itemsize

    # Lane-dense layout: rows = (n, c) instances, lanes = spatial elements.
    x2 = x.reshape(R, L)

    # Pad L to a multiple of 128 (unmasked stores) only when the overhead is small.
    L_pad = ((L + 127) // 128) * 128
    padded = (L_pad != L) and ((L_pad - L) * 8 <= L)  # pad fraction <= 12.5 %
    if padded:
        x2 = jnp.pad(x2, ((0, 0), (0, L_pad - L)))
    else:
        L_pad = L
    # TODO(synk): for very small H*W (< ~64) a channels-on-lanes layout would beat
    # both padding and masked stores; not implemented here.

    tr = _choose_row_tile(R, L_pad, itemsize, block_cap_bytes)
    if tr is not None:
        out2 = _run_fused(x2, L, tr)
    else:
        out2 = _run_spatially_tiled(x2, L, block_cap_bytes)

    if padded:
        out2 = out2[:, :L]
    return out2.reshape(N, C, H, W)


# ---------------------------------------------------------------------------
# Reference + tests.
# ---------------------------------------------------------------------------
def _reference_in2d(x):
    xf = x.astype(jnp.float32)
    mean = jnp.mean(xf, axis=(2, 3), keepdims=True)
    var = jnp.mean((xf - mean) ** 2, axis=(2, 3), keepdims=True)
    return ((xf - mean) / jnp.sqrt(var + EPS)).astype(x.dtype)


if __name__ == "__main__":
    key = jax.random.PRNGKey(0)
    # Small NCHW input consistent with InstanceNorm2d(in_features=4).
    x = jax.random.normal(key, (2, 4, 16, 16), dtype=jnp.float32)

    out = jax.block_until_ready(normalization_layer_in2d(x))
    ref = _reference_in2d(x)
    assert out.shape == x.shape and out.dtype == x.dtype
    assert jnp.allclose(out, ref, atol=1e-4, rtol=1e-4)

    # bf16 smoke test (f32 math in-kernel, single cast at the store).
    xb = x.astype(jnp.bfloat16)
    out_b = jax.block_until_ready(normalization_layer_in2d(xb))
    ref_b = _reference_in2d(xb)
    assert out_b.shape == xb.shape and out_b.dtype == xb.dtype
    assert jnp.allclose(out_b.astype(jnp.float32), ref_b.astype(jnp.float32),
                        atol=5e-2, rtol=5e-2)

    # H*W not a multiple of 128 and too small to pad (masked-store path).
    x_odd = jax.random.normal(jax.random.PRNGKey(1), (2, 4, 7, 7), dtype=jnp.float32)
    out_odd = jax.block_until_ready(normalization_layer_in2d(x_odd))
    assert jnp.allclose(out_odd, _reference_in2d(x_odd), atol=1e-4, rtol=1e-4)

    # Small-fraction pad path (57*57 = 3249 -> padded to 3328 lanes).
    x_pad = jax.random.normal(jax.random.PRNGKey(2), (1, 8, 57, 57), dtype=jnp.float32)
    out_pad = jax.block_until_ready(normalization_layer_in2d(x_pad))
    assert jnp.allclose(out_pad, _reference_in2d(x_pad), atol=1e-4, rtol=1e-4)

    # Spatial-tiling fallback, forced with a tiny block cap (stats + apply passes).
    out_fb = jax.block_until_ready(normalization_layer_in2d(x, block_cap_bytes=4096))
    assert jnp.allclose(out_fb, ref, atol=1e-4, rtol=1e-4)

    print("KERNEL_OK")
</pallas_src>

<mosaic_0001>
module attributes {stable_mosaic.version = 11 : i64} {
  func.func @_in2d_rows_kernel(%arg0: i32, %arg1: memref<8x256xf32, #tpu.memory_space<vmem>>, %arg2: memref<8x256xf32, #tpu.memory_space<vmem>>) attributes {dimension_semantics = [#tpu.dimension_semantics<parallel>], iteration_bounds = array<i64: 1>, scalar_prefetch = 0 : i64, scratch_operands = 0 : i64, tpu.core_type = #tpu.core_type<tc>, window_params = [{transform_indices = @transform_0, window_bounds = array<i64: 8, 256>}, {transform_indices = @transform_1, window_bounds = array<i64: 8, 256>}]} {
    %c0 = arith.constant 0 : index
    %c0_0 = arith.constant 0 : index
    %0 = vector.load %arg1[%c0, %c0_0] : memref<8x256xf32, #tpu.memory_space<vmem>>, vector<8x256xf32>
    %cst = arith.constant dense<0.000000e+00> : vector<8xf32>
    %1 = vector.multi_reduction <add>, %0, %cst [1] : vector<8x256xf32> to vector<8xf32>
    %2 = vector.shape_cast %1 : vector<8xf32> to vector<8x1xf32>
    %cst_1 = arith.constant 3.906250e-03 : f32
    %3 = vector.broadcast %cst_1 : f32 to vector<8x1xf32>
    %4 = arith.mulf %2, %3 : vector<8x1xf32>
    %5 = vector.broadcast %4 : vector<8x1xf32> to vector<8x256xf32>
    %6 = arith.subf %0, %5 : vector<8x256xf32>
    %7 = arith.mulf %6, %6 : vector<8x256xf32>
    %cst_2 = arith.constant dense<0.000000e+00> : vector<8xf32>
    %8 = vector.multi_reduction <add>, %7, %cst_2 [1] : vector<8x256xf32> to vector<8xf32>
    %9 = vector.shape_cast %8 : vector<8xf32> to vector<8x1xf32>
    %cst_3 = arith.constant 3.906250e-03 : f32
    %10 = vector.broadcast %cst_3 : f32 to vector<8x1xf32>
    %11 = arith.mulf %9, %10 : vector<8x1xf32>
    %cst_4 = arith.constant 9.99999974E-6 : f32
    %12 = vector.broadcast %cst_4 : f32 to vector<8x1xf32>
    %13 = arith.addf %11, %12 : vector<8x1xf32>
    %14 = math.rsqrt %13 : vector<8x1xf32>
    %15 = vector.broadcast %14 : vector<8x1xf32> to vector<8x256xf32>
    %16 = arith.mulf %6, %15 : vector<8x256xf32>
    %c0_5 = arith.constant 0 : index
    %c0_6 = arith.constant 0 : index
    %17 = vector.load %arg2[%c0_5, %c0_6] : memref<8x256xf32, #tpu.memory_space<vmem>>, vector<8x256xf32>
    tpu.vector_store %arg2[%c0_5, %c0_6], %16 {strides = array<i32>} : memref<8x256xf32, #tpu.memory_space<vmem>>, vector<8x256xf32>,
    return
  }
  func.func @transform_0(%arg0: i32) -> (i32, i32) {
    %c0_i32 = arith.constant 0 : i32
    %c0_i32_0 = arith.constant 0 : i32
    return %arg0, %c0_i32 : i32, i32
  }
  func.func @transform_1(%arg0: i32) -> (i32, i32) {
    %c0_i32 = arith.constant 0 : i32
    %c0_i32_0 = arith.constant 0 : i32
    return %arg0, %c0_i32 : i32, i32
  }
}

</mosaic_0001>

<llo_original>
// kernel: tpu_custom_call.1
$region0: #{tpu_custom_call.1}
  #allocation0 [shape = 'u32[]', space=smem, size = 0x4, offset = 0x4, fixed_abs, tag = 'smem constant byte address 0x4 - core index']
  #allocation1 [shape = 'u32[144,128]{1,0:T(1,128)}', space=vmem, size = 0x12000, scoped, tag = 'internal scratch']
  %s0 = inlined_call_operand.hbm [shape: f32[8,256], index: 0, kind: input, shape index: {}]
  %s1 = inlined_call_operand.hbm [shape: f32[8,256], index: 1, kind: output, shape index: {}]
  %s2 = sld [smem:[#allocation0]]
  $region18: #{tpu_custom_call.1} parent=0
    _
  %s4 = ssub.s32 1, %s2
  %s5 = scalar_select 0, %s4, %s2
  $region1: #{tpu_custom_call.1} parent=0
    #allocation2 [shape = 'u8[8192]{0}', space=vmem, size = 0x2000, scoped, tag = 'input window, operand 0, single buffered']
    #allocation3 [shape = 's32[1]{0}', space=sflag, size = 0x4, scoped, tag = 'scoped memory for tpu_custom_call.1']
    #allocation4 [shape = 's32[1]{0}', space=sflag, size = 0x4, scoped, tag = 'scoped memory for tpu_custom_call.1']
    #allocation5 [shape = 'u8[8192]{0}', space=vmem, size = 0x2000, scoped, tag = 'output window, operand 0, single buffered']
    %6 = vsyncpa [#allocation3], 0
    %7 = vsyncpa [#allocation4], 0
    // Predicated region
    $region2: #{tpu_custom_call.1} parent=1 // pred_check
      _
    $region3: #{tpu_custom_call.1} parent=1 // pred_check_branch
      %9 = sbr.rel (0) target = $region5
    $region4: #{tpu_custom_call.1} parent=1 // pred_region
      %s11 = ssub.s32 256, 256
      %12 = vsyncadd [#allocation3], %s11
      %s14 = sshll.u32 [#allocation2], 4
      %s15 = int_to_ptr.vmem [resolvable:$true] %s14
      %17 = dma.hbm_to_vmem [thread:$0]  %s0, 256, %s15, [#allocation3]
    $region5: #{tpu_custom_call.1} parent=1 // pred_fallthru
      _
    // Predicated region
    $region6: #{tpu_custom_call.1} parent=1 // pred_check
      _
    $region7: #{tpu_custom_call.1} parent=1 // pred_check_branch
      %19 = sbr.rel (0) target = $region9
    $region8: #{tpu_custom_call.1} parent=1 // pred_region
      %20 = dma.done [#allocation3], 256
    $region9: #{tpu_custom_call.1} parent=1 // pred_fallthru
      _
    %v21 = vld [vmem:[#allocation2] sm:$0xff]
    %v22 = vld [vmem:[#allocation2 + $0x8] sm:$0xff]
    %v23 = vadd.f32 %v21, %v22
    %24 = vadd.xlane.f32.xlu0 %v23
    %v25 = vpop.xlane.xlu0 %24
    %v26 = vmul.f32 %v25, 0.00390625
    %v27 = vsub.f32 %v21, %v26
    %v28 = vsub.f32 %v22, %v26
    %v29 = vmul.f32 %v27, %v27
    %v30 = vmul.f32 %v28, %v28
    %v31 = vadd.f32 %v29, %v30
    %32 = vadd.xlane.f32.xlu0 %v31
    %v33 = vpop.xlane.xlu0 %32
    %v34 = vmul.f32 %v33, 0.00390625
    %v35 = vadd.f32 %v34, 1e-05
    %v36 = vrsqrt.pop %v35
    %v37 = vmul.f32 %v27, %v36
    %v38 = vmul.f32 %v28, %v36
    %39 = vst [vmem:[#allocation5] sm:$0xff] %v37
    %40 = vst [vmem:[#allocation5 + $0x8] sm:$0xff] %v38
    // Predicated region
    $region10: #{tpu_custom_call.1} parent=1 // pred_check
      _
    $region11: #{tpu_custom_call.1} parent=1 // pred_check_branch
      %42 = sbr.rel (0) target = $region13
    $region12: #{tpu_custom_call.1} parent=1 // pred_region
      %s44 = ssub.s32 256, 256
      %45 = vsyncadd [#allocation4], %s44
      %s47 = sshll.u32 [#allocation5], 4
      %s48 = int_to_ptr.vmem [resolvable:$true] %s47
      %50 = dma.vmem_to_hbm [thread:$0]  %s48, 256, %s1, [#allocation4]
    $region13: #{tpu_custom_call.1} parent=1 // pred_fallthru
      _
    // Predicated region
    $region14: #{tpu_custom_call.1} parent=1 // pred_check
      _
    $region15: #{tpu_custom_call.1} parent=1 // pred_check_branch
      %52 = sbr.rel (0) target = $region17
    $region16: #{tpu_custom_call.1} parent=1 // pred_region
      %53 = dma.done [#allocation4], 256
    $region17: #{tpu_custom_call.1} parent=1 // pred_fallthru
      _
    %54 = vsyncpa [#allocation3], 1
    %55 = vsyncpa [#allocation4], 1

</llo_original>
